<compile_context>
chip_gen: v6e
topology: v6e:2x2x1
jax: 0.10.0
libtpu: 0.0.40
codegen_flags: <defaults>
</compile_context>

<pallas_src>
import functools

import jax
import jax.numpy as jnp
import numpy as np
from jax.experimental import pallas as pl
from jax.experimental.pallas import tpu as pltpu


def _round_up(x: int, m: int) -> int:
    return (x + m - 1) // m * m


def _cdiv(a: int, b: int) -> int:
    return -(-a // b)


def _vmem_capacity_bytes() -> int:
    """Per-core VMEM capacity; conservative fallback if the query is unavailable."""
    try:
        cap = int(pltpu.get_tpu_info().vmem_capacity_bytes)
        return min(max(cap, 32 * 1024 * 1024), 128 * 1024 * 1024)
    except Exception:
        return 64 * 1024 * 1024  # v7x per-TensorCore VMEM (smallest of the three gens)


def _invariant_spec(shape):
    """Grid-invariant operand: single-buffered if this JAX supports pipeline_mode."""
    idx = lambda b: (0,) * len(shape)
    try:
        return pl.BlockSpec(shape, idx, pipeline_mode=pl.Buffered(1))
    except Exception:
        return pl.BlockSpec(shape, idx)


def bahdanau_kernel(q_ref, k_ref, wwT_ref, uwT_ref, bias_ref, vrow_ref,
                    ctx_ref, wts_ref, *, s_valid, s_chunk):
    Bt, Sp, Hp = k_ref.shape
    n_chunks = Sp // s_chunk

    # w(query) with the pre-summed (wb + ub) bias folded in once per row.
    wq = jnp.dot(q_ref[...], wwT_ref[...],
                 preferred_element_type=jnp.float32) + bias_ref[...]          # (Bt, Hp) f32
    vrow = vrow_ref[...]                                                       # (1, Hp) f32

    # Pass 1: raw scores, one S-chunk at a time (bounds tanh intermediates to
    # O(Bt*Sc*Hp)).  Raw scores are staged in the VMEM-resident weights block.
    for c in range(n_chunks):
        lo, hi = c * s_chunk, (c + 1) * s_chunk
        k_c = k_ref[:, lo:hi, :]                                               # (Bt, Sc, Hp), native dtype
        uk = jnp.dot(k_c.reshape(Bt * s_chunk, Hp), uwT_ref[...],
                     preferred_element_type=jnp.float32)                       # (Bt*Sc, Hp) f32
        t = jnp.tanh(wq[:, None, :] + uk.reshape(Bt, s_chunk, Hp))             # (Bt, Sc, Hp) f32
        # v-projection as a VPU mul + lane reduce, f32-accumulated.
        wts_ref[:, lo:hi] = jnp.sum(t * vrow, axis=-1)                         # (Bt, Sc)

    # Softmax over the (padded) sequence axis; mask padded positions to -inf.
    scores = wts_ref[...]                                                      # (Bt, Sp) f32
    if s_valid < Sp:
        lane = jax.lax.broadcasted_iota(jnp.int32, (Bt, Sp), 1)
        scores = jnp.where(lane < s_valid, scores, -jnp.inf)
    m = jnp.max(scores, axis=-1, keepdims=True)
    e = jnp.exp(scores - m)
    # approx=False: approx reciprocal error is visible at the 1e-5 tolerance this
    # script validates against; flip to approx=True when that slack is acceptable.
    weights = e * pl.reciprocal(jnp.sum(e, axis=-1, keepdims=True), approx=False)
    wts_ref[...] = weights

    # Pass 2: context accumulation, chunked over the same VMEM-resident keys.
    ctx = jnp.zeros((Bt, Hp), jnp.float32)
    for c in range(n_chunks):
        lo, hi = c * s_chunk, (c + 1) * s_chunk
        k_c = k_ref[:, lo:hi, :].astype(jnp.float32)
        ctx = ctx + jnp.sum(weights[:, lo:hi][:, :, None] * k_c, axis=1)
    ctx_ref[...] = ctx.astype(ctx_ref.dtype)


def bahdanau_attention(query, keys, params, *, max_block_rows=None, s_chunk_target=256):
    """query: (B, 1, H), keys: (B, S, H). Returns (context (B,1,H), weights (B,1,S))."""
    B, _, H = query.shape
    _, S, _ = keys.shape
    ww, wb, uw, ub, vw, vb = params
    del vb  # constant shift under softmax -> no effect on weights or context.

    f32 = jnp.float32
    out_dt = query.dtype
    # Keys stay in their native dtype (halves DMA for bf16 models); MXU operands
    # (query / projection weights) match it, accumulation is always f32.
    mm_dt = keys.dtype if keys.dtype == jnp.bfloat16 else f32

    Hp = _round_up(H, 128)                       # lane-pad hidden dim
    # Sequence chunking: Sc multiple of 8 (free reshape), Sp = n_chunks*Sc >= S
    # with minimal padding.
    n_chunks = max(1, _cdiv(S, s_chunk_target))
    Sc = _round_up(_cdiv(S, n_chunks), 8)
    Sp = n_chunks * Sc

    keys_item = np.dtype(keys.dtype).itemsize
    mm_item = np.dtype(mm_dt).itemsize

    # --- Batch-tile sizing from a VMEM budget --------------------------------
    vmem_cap = _vmem_capacity_bytes()
    budget = int(vmem_cap * 0.55)
    per_row = (2 * Sp * Hp * keys_item           # keys block (double-buffered)
               + 2 * Hp * mm_item                # query block (double-buffered)
               + 2 * Hp * 4 + Hp * 4             # ctx out (x2) + wq
               + 4 * Sp * 4                      # wts out (x2) + score/weight temps
               + 3 * Sc * Hp * 4)                # chunk intermediates (uk / tanh / prod)
    fixed = 2 * Hp * Hp * mm_item + 2 * Hp * 4 + (1 << 20)   # single-buffered invariants + slack
    Bt_cap = max(8, (max(budget - fixed, 0) // per_row) // 8 * 8)
    if max_block_rows is not None:
        Bt_cap = max(8, min(Bt_cap, _round_up(max_block_rows, 8)))

    B8 = _round_up(B, 8)
    n_tiles = max(1, _cdiv(B8, Bt_cap))
    if B8 >= 16:
        n_tiles = max(n_tiles, 2)                # keep both v7x TensorCores busy
    Bt = _round_up(_cdiv(B8, n_tiles), 8)        # bounds batch-padding waste
    B_pad = n_tiles * Bt

    est_bytes = fixed + per_row * Bt
    vmem_limit = int(min(int(vmem_cap * 0.9),
                         max(2 * est_bytes, 32 * 1024 * 1024)))

    # --- Wrapper-side, grid-invariant prep (pads/casts only when needed) ------
    def pad2(x, r, c):
        pr, pc = r - x.shape[0], c - x.shape[1]
        return x if (pr == 0 and pc == 0) else jnp.pad(x, ((0, pr), (0, pc)))

    q2 = pad2(query.reshape(B, H).astype(mm_dt), B_pad, Hp)
    kp = keys                                    # native dtype, no upcast
    if (B_pad - B) or (Sp - S) or (Hp - H):
        kp = jnp.pad(keys, ((0, B_pad - B), (0, Sp - S), (0, Hp - H)))
    wwT = pad2(ww.T.astype(mm_dt), Hp, Hp)
    uwT = pad2(uw.T.astype(mm_dt), Hp, Hp)
    bias = pad2((wb + ub).reshape(1, H).astype(f32), 1, Hp)
    vrow = pad2(vw.reshape(1, H).astype(f32), 1, Hp)

    kernel = functools.partial(bahdanau_kernel, s_valid=S, s_chunk=Sc)

    ctx_p, wts_p = pl.pallas_call(
        kernel,
        out_shape=(
            jax.ShapeDtypeStruct((B_pad, Hp), f32),
            jax.ShapeDtypeStruct((B_pad, Sp), f32),
        ),
        grid_spec=pltpu.PrefetchScalarGridSpec(
            num_scalar_prefetch=0,
            grid=(n_tiles,),
            in_specs=[
                pl.BlockSpec((Bt, Hp), lambda b: (b, 0)),         # query (flattened)
                pl.BlockSpec((Bt, Sp, Hp), lambda b: (b, 0, 0)),  # keys (native dtype)
                _invariant_spec((Hp, Hp)),                        # w.T (padded)
                _invariant_spec((Hp, Hp)),                        # u.T (padded)
                _invariant_spec((1, Hp)),                         # wb + ub (padded)
                _invariant_spec((1, Hp)),                         # v weight row (padded)
            ],
            out_specs=[
                pl.BlockSpec((Bt, Hp), lambda b: (b, 0)),         # context, lane-dense
                pl.BlockSpec((Bt, Sp), lambda b: (b, 0)),         # weights, 2-D slab
            ],
        ),
        compiler_params=pltpu.CompilerParams(
            dimension_semantics=("parallel",),                    # shard batch tiles across TCs
            vmem_limit_bytes=vmem_limit,
        ),
    )(q2, kp, wwT, uwT, bias, vrow)

    context = ctx_p[:B, :H].reshape(B, 1, H).astype(out_dt)
    weights = wts_p[:B, :S].reshape(B, 1, S).astype(out_dt)
    return context, weights


def reference(query, keys, params):
    ww, wb, uw, ub, vw, vb = params
    wq = query @ ww.T + wb             # (B, 1, H)
    uk = keys @ uw.T + ub              # (B, S, H)
    s = jnp.tanh(wq + uk) @ vw.T + vb  # (B, S, 1)
    scores = jnp.swapaxes(s, 1, 2)     # (B, 1, S)
    weights = jax.nn.softmax(scores, axis=-1)
    context = weights @ keys           # (B, 1, H)
    return context, weights


if __name__ == "__main__":
    def run_case(B, S, H, seed):
        key = jax.random.PRNGKey(seed)
        k0, k1, k2, k3, k4, k5, k6, k7 = jax.random.split(key, 8)
        # Parameter shapes match nn.Linear(H,H), nn.Linear(H,H), nn.Linear(H,1).
        scale = 1.0 / np.sqrt(H)
        ww = jax.random.uniform(k0, (H, H), jnp.float32, -scale, scale)
        wb = jax.random.uniform(k1, (1, H), jnp.float32, -scale, scale)
        uw = jax.random.uniform(k2, (H, H), jnp.float32, -scale, scale)
        ub = jax.random.uniform(k3, (1, H), jnp.float32, -scale, scale)
        vw = jax.random.uniform(k4, (1, H), jnp.float32, -scale, scale)
        vb = jax.random.uniform(k5, (1, 1), jnp.float32, -scale, scale)
        params = (ww, wb, uw, ub, vw, vb)

        query = jax.random.normal(k6, (B, 1, H), jnp.float32)
        keys = jax.random.normal(k7, (B, S, H), jnp.float32)

        ctx, wts = bahdanau_attention(query, keys, params)
        jax.block_until_ready((ctx, wts))

        ctx_ref, wts_ref = reference(query, keys, params)
        np.testing.assert_allclose(np.asarray(ctx), np.asarray(ctx_ref), rtol=1e-5, atol=1e-5)
        np.testing.assert_allclose(np.asarray(wts), np.asarray(wts_ref), rtol=1e-5, atol=1e-5)

    run_case(B=2, S=8, H=32, seed=0)      # nominal small shape
    run_case(B=20, S=12, H=32, seed=1)    # exercises multi-tile batch grid + S-pad masking

    print("KERNEL_OK")
</pallas_src>

<mosaic_0001>
module attributes {stable_mosaic.version = 11 : i64} {
  func.func @bahdanau_kernel(%arg0: i32, %arg1: memref<8x128xf32, #tpu.memory_space<vmem>>, %arg2: memref<8x8x128xf32, #tpu.memory_space<vmem>>, %arg3: memref<128x128xf32, #tpu.memory_space<vmem>>, %arg4: memref<128x128xf32, #tpu.memory_space<vmem>>, %arg5: memref<1x128xf32, #tpu.memory_space<vmem>>, %arg6: memref<1x128xf32, #tpu.memory_space<vmem>>, %arg7: memref<8x128xf32, #tpu.memory_space<vmem>>, %arg8: memref<8x8xf32, #tpu.memory_space<vmem>>) attributes {dimension_semantics = [#tpu.dimension_semantics<parallel>], iteration_bounds = array<i64: 1>, scalar_prefetch = 0 : i64, scratch_operands = 0 : i64, tpu.core_type = #tpu.core_type<tc>, window_params = [{transform_indices = @transform_0, window_bounds = array<i64: 8, 128>}, {transform_indices = @transform_1, window_bounds = array<i64: 8, 8, 128>}, {pipeline_mode = #tpu.pipeline_mode<synchronous>, transform_indices = @transform_2, window_bounds = array<i64: 128, 128>}, {pipeline_mode = #tpu.pipeline_mode<synchronous>, transform_indices = @transform_3, window_bounds = array<i64: 128, 128>}, {pipeline_mode = #tpu.pipeline_mode<synchronous>, transform_indices = @transform_4, window_bounds = array<i64: 1, 128>}, {pipeline_mode = #tpu.pipeline_mode<synchronous>, transform_indices = @transform_5, window_bounds = array<i64: 1, 128>}, {transform_indices = @transform_6, window_bounds = array<i64: 8, 128>}, {transform_indices = @transform_7, window_bounds = array<i64: 8, 8>}]} {
    %c0 = arith.constant 0 : index
    %c0_0 = arith.constant 0 : index
    %0 = vector.load %arg1[%c0, %c0_0] : memref<8x128xf32, #tpu.memory_space<vmem>>, vector<8x128xf32>
    %c0_1 = arith.constant 0 : index
    %c0_2 = arith.constant 0 : index
    %1 = vector.load %arg3[%c0_1, %c0_2] : memref<128x128xf32, #tpu.memory_space<vmem>>, vector<128x128xf32>
    %cst = arith.constant dense<0.000000e+00> : vector<8x128xf32>
    %2 = tpu.matmul %0, %1, %cst {dimension_numbers = #tpu.dot_dimension_numbers<[1], [0], [0], [1], [0, 0, 1, 1], [], []>} : vector<8x128xf32>, vector<128x128xf32>, vector<8x128xf32> -> vector<8x128xf32>
    %c0_3 = arith.constant 0 : index
    %c0_4 = arith.constant 0 : index
    %3 = vector.load %arg5[%c0_3, %c0_4] : memref<1x128xf32, #tpu.memory_space<vmem>>, vector<1x128xf32>
    %4 = vector.broadcast %3 : vector<1x128xf32> to vector<8x128xf32>
    %5 = arith.addf %2, %4 : vector<8x128xf32>
    %c0_5 = arith.constant 0 : index
    %c0_6 = arith.constant 0 : index
    %6 = vector.load %arg6[%c0_5, %c0_6] : memref<1x128xf32, #tpu.memory_space<vmem>>, vector<1x128xf32>
    %c0_7 = arith.constant 0 : index
    %c0_8 = arith.constant 0 : index
    %c0_9 = arith.constant 0 : index
    %7 = vector.load %arg2[%c0_7, %c0_8, %c0_9] : memref<8x8x128xf32, #tpu.memory_space<vmem>>, vector<8x8x128xf32>
    %8 = vector.shape_cast %7 : vector<8x8x128xf32> to vector<64x128xf32>
    %c0_10 = arith.constant 0 : index
    %c0_11 = arith.constant 0 : index
    %9 = vector.load %arg4[%c0_10, %c0_11] : memref<128x128xf32, #tpu.memory_space<vmem>>, vector<128x128xf32>
    %cst_12 = arith.constant dense<0.000000e+00> : vector<64x128xf32>
    %10 = tpu.matmul %8, %9, %cst_12 {dimension_numbers = #tpu.dot_dimension_numbers<[1], [0], [0], [1], [0, 0, 1, 1], [], []>} : vector<64x128xf32>, vector<128x128xf32>, vector<64x128xf32> -> vector<64x128xf32>
    %11 = vector.shape_cast %5 : vector<8x128xf32> to vector<8x1x128xf32>
    %12 = vector.shape_cast %10 : vector<64x128xf32> to vector<8x8x128xf32>
    %13 = vector.broadcast %11 : vector<8x1x128xf32> to vector<8x8x128xf32>
    %14 = arith.addf %13, %12 : vector<8x8x128xf32>
    %15 = math.tanh %14 : vector<8x8x128xf32>
    %16 = vector.shape_cast %6 : vector<1x128xf32> to vector<1x1x128xf32>
    %17 = vector.broadcast %16 : vector<1x1x128xf32> to vector<8x8x128xf32>
    %18 = arith.mulf %15, %17 : vector<8x8x128xf32>
    %cst_13 = arith.constant dense<0.000000e+00> : vector<8x8xf32>
    %19 = vector.multi_reduction <add>, %18, %cst_13 [2] : vector<8x8x128xf32> to vector<8x8xf32>
    %c0_14 = arith.constant 0 : index
    %c0_15 = arith.constant 0 : index
    %20 = vector.load %arg8[%c0_14, %c0_15] : memref<8x8xf32, #tpu.memory_space<vmem>>, vector<8x8xf32>
    tpu.vector_store %arg8[%c0_14, %c0_15], %19 {strides = array<i32>} : memref<8x8xf32, #tpu.memory_space<vmem>>, vector<8x8xf32>,
    %c0_16 = arith.constant 0 : index
    %c0_17 = arith.constant 0 : index
    %21 = vector.load %arg8[%c0_16, %c0_17] : memref<8x8xf32, #tpu.memory_space<vmem>>, vector<8x8xf32>
    %cst_18 = arith.constant dense<0xFF800000> : vector<8xf32>
    %22 = vector.multi_reduction <maximumf>, %21, %cst_18 [1] : vector<8x8xf32> to vector<8xf32>
    %23 = vector.shape_cast %22 : vector<8xf32> to vector<8x1xf32>
    %24 = vector.broadcast %23 : vector<8x1xf32> to vector<8x8xf32>
    %25 = arith.subf %21, %24 : vector<8x8xf32>
    %26 = math.exp %25 : vector<8x8xf32>
    %cst_19 = arith.constant dense<0.000000e+00> : vector<8xf32>
    %27 = vector.multi_reduction <add>, %26, %cst_19 [1] : vector<8x8xf32> to vector<8xf32>
    %28 = vector.shape_cast %27 : vector<8xf32> to vector<8x1xf32>
    %29 = tpu.reciprocal %28 : vector<8x1xf32> -> vector<8x1xf32>
    %30 = vector.broadcast %29 : vector<8x1xf32> to vector<8x8xf32>
    %31 = arith.mulf %26, %30 : vector<8x8xf32>
    %c0_20 = arith.constant 0 : index
    %c0_21 = arith.constant 0 : index
    %32 = vector.load %arg8[%c0_20, %c0_21] : memref<8x8xf32, #tpu.memory_space<vmem>>, vector<8x8xf32>
    tpu.vector_store %arg8[%c0_20, %c0_21], %31 {strides = array<i32>} : memref<8x8xf32, #tpu.memory_space<vmem>>, vector<8x8xf32>,
    %cst_22 = arith.constant 0.000000e+00 : f32
    %33 = vector.broadcast %cst_22 : f32 to vector<8x128xf32>
    %c0_23 = arith.constant 0 : index
    %c0_24 = arith.constant 0 : index
    %c0_25 = arith.constant 0 : index
    %34 = vector.load %arg2[%c0_23, %c0_24, %c0_25] : memref<8x8x128xf32, #tpu.memory_space<vmem>>, vector<8x8x128xf32>
    %35 = vector.shape_cast %31 : vector<8x8xf32> to vector<8x8x1xf32>
    %36 = vector.broadcast %35 : vector<8x8x1xf32> to vector<8x8x128xf32>
    %37 = arith.mulf %36, %34 : vector<8x8x128xf32>
    %cst_26 = arith.constant dense<0.000000e+00> : vector<8x128xf32>
    %38 = vector.multi_reduction <add>, %37, %cst_26 [1] : vector<8x8x128xf32> to vector<8x128xf32>
    %39 = arith.addf %33, %38 : vector<8x128xf32>
    %c0_27 = arith.constant 0 : index
    %c0_28 = arith.constant 0 : index
    %40 = vector.load %arg7[%c0_27, %c0_28] : memref<8x128xf32, #tpu.memory_space<vmem>>, vector<8x128xf32>
    tpu.vector_store %arg7[%c0_27, %c0_28], %39 {strides = array<i32>} : memref<8x128xf32, #tpu.memory_space<vmem>>, vector<8x128xf32>,
    return
  }
  func.func @transform_0(%arg0: i32) -> (i32, i32) {
    %c0_i32 = arith.constant 0 : i32
    %c0_i32_0 = arith.constant 0 : i32
    return %arg0, %c0_i32 : i32, i32
  }
  func.func @transform_1(%arg0: i32) -> (i32, i32, i32) {
    %c0_i32 = arith.constant 0 : i32
    %c0_i32_0 = arith.constant 0 : i32
    %c0_i32_1 = arith.constant 0 : i32
    return %arg0, %c0_i32, %c0_i32_0 : i32, i32, i32
  }
  func.func @transform_2(%arg0: i32) -> (i32, i32) {
    %c0_i32 = arith.constant 0 : i32
    %c0_i32_0 = arith.constant 0 : i32
    %c0_i32_1 = arith.constant 0 : i32
    return %c0_i32, %c0_i32_0 : i32, i32
  }
  func.func @transform_3(%arg0: i32) -> (i32, i32) {
    %c0_i32 = arith.constant 0 : i32
    %c0_i32_0 = arith.constant 0 : i32
    %c0_i32_1 = arith.constant 0 : i32
    return %c0_i32, %c0_i32_0 : i32, i32
  }
  func.func @transform_4(%arg0: i32) -> (i32, i32) {
    %c0_i32 = arith.constant 0 : i32
    %c0_i32_0 = arith.constant 0 : i32
    %c0_i32_1 = arith.constant 0 : i32
    return %c0_i32, %c0_i32_0 : i32, i32
  }
  func.func @transform_5(%arg0: i32) -> (i32, i32) {
    %c0_i32 = arith.constant 0 : i32
    %c0_i32_0 = arith.constant 0 : i32
    %c0_i32_1 = arith.constant 0 : i32
    return %c0_i32, %c0_i32_0 : i32, i32
  }
  func.func @transform_6(%arg0: i32) -> (i32, i32) {
    %c0_i32 = arith.constant 0 : i32
    %c0_i32_0 = arith.constant 0 : i32
    return %arg0, %c0_i32 : i32, i32
  }
  func.func @transform_7(%arg0: i32) -> (i32, i32) {
    %c0_i32 = arith.constant 0 : i32
    %c0_i32_0 = arith.constant 0 : i32
    return %arg0, %c0_i32 : i32, i32
  }
}

</mosaic_0001>

<llo_original>
// kernel: tpu_custom_call.1
$region0: #{tpu_custom_call.1}
  #allocation0 [shape = 'u32[]', space=smem, size = 0x4, offset = 0x4, fixed_abs, tag = 'smem constant byte address 0x4 - core index']
  #allocation1 [shape = 'u32[144,128]{1,0:T(1,128)}', space=vmem, size = 0x12000, scoped, tag = 'internal scratch']
  %s0 = inlined_call_operand.hbm [shape: f32[8,128], index: 0, kind: input, shape index: {}]
  %s1 = inlined_call_operand.hbm [shape: f32[8,8,128], index: 1, kind: input, shape index: {}]
  %s2 = inlined_call_operand.hbm [shape: f32[128,128], index: 2, kind: input, shape index: {}]
  %s3 = inlined_call_operand.hbm [shape: f32[128,128], index: 3, kind: input, shape index: {}]
  %s4 = inlined_call_operand.vmem [shape: f32[1,128], index: 4, kind: input, shape index: {}]
  %s5 = inlined_call_operand.vmem [shape: f32[1,128], index: 5, kind: input, shape index: {}]
  %s6 = inlined_call_operand.hbm [shape: f32[8,128], index: 6, kind: output, shape index: {0}]
  %s7 = inlined_call_operand.hbm [shape: f32[8,8], index: 7, kind: output, shape index: {1}]
  %8 = xla_tuple %s6, %s7
  %s9 = sld [smem:[#allocation0]]
  $region58: #{tpu_custom_call.1} parent=0
    _
  %s11 = ssub.s32 1, %s9
  %s12 = scalar_select 0, %s11, %s9
  $region1: #{tpu_custom_call.1} parent=0
    #allocation2 [shape = 'u8[4096]{0}', space=vmem, size = 0x1000, scoped, tag = 'input window, operand 0, single buffered']
    #allocation3 [shape = 's32[1]{0}', space=sflag, size = 0x4, scoped, tag = 'scoped memory for tpu_custom_call.1']
    #allocation4 [shape = 's32[1]{0}', space=sflag, size = 0x4, scoped, tag = 'scoped memory for tpu_custom_call.1']
    #allocation5 [shape = 'u8[32768]{0}', space=vmem, size = 0x8000, scoped, tag = 'input window, operand 1, single buffered']
    #allocation6 [shape = 's32[1]{0}', space=sflag, size = 0x4, scoped, tag = 'scoped memory for tpu_custom_call.1']
    #allocation7 [shape = 'u8[65536]{0}', space=vmem, size = 0x10000, scoped, tag = 'input window, operand 2, single buffered']
    #allocation8 [shape = 'u8[65536]{0}', space=vmem, size = 0x10000, scoped, tag = 'input window, operand 3, single buffered']
    #allocation9 [shape = 's32[1]{0}', space=sflag, size = 0x4, scoped, tag = 'scoped memory for tpu_custom_call.1']
    #allocation10 [shape = 'u8[4096]{0}', space=vmem, size = 0x1000, scoped, tag = 'output window, operand 0, single buffered']
    #allocation11 [shape = 'u8[4096]{0}', space=vmem, size = 0x1000, scoped, tag = 'output window, operand 1, single buffered']
    #allocation12 [shape = 's32[1]{0}', space=sflag, size = 0x4, scoped, tag = 'scoped memory for tpu_custom_call.1']
    %13 = vsyncpa [#allocation3], 0
    %14 = vsyncpa [#allocation6], 0
    %15 = vsyncpa [#allocation9], 0
    %16 = vsyncpa [#allocation4], 0
    %17 = vsyncpa [#allocation12], 0
    // Predicated region
    $region2: #{tpu_custom_call.1} parent=1 // pred_check
      _
    $region3: #{tpu_custom_call.1} parent=1 // pred_check_branch
      %19 = sbr.rel (0) target = $region5
    $region4: #{tpu_custom_call.1} parent=1 // pred_region
      %s21 = ssub.s32 128, 128
      %22 = vsyncadd [#allocation3], %s21
      %s24 = sshll.u32 [#allocation2], 4
      %s25 = int_to_ptr.vmem [resolvable:$true] %s24
      %27 = dma.hbm_to_vmem [thread:$0]  %s0, 128, %s25, [#allocation3]
    $region5: #{tpu_custom_call.1} parent=1 // pred_fallthru
      _
    // Predicated region
    $region6: #{tpu_custom_call.1} parent=1 // pred_check
      _
    $region7: #{tpu_custom_call.1} parent=1 // pred_check_branch
      %29 = sbr.rel (0) target = $region9
    $region8: #{tpu_custom_call.1} parent=1 // pred_region
      %s31 = ssub.s32 1024, 1024
      %32 = vsyncadd [#allocation6], %s31
      %s33 = sshll.u32 [#allocation5], 4
      %s34 = int_to_ptr.vmem [resolvable:$true] %s33
      %39 = dma.hbm_to_vmem [thread:$0]  %s1, 1024, %s34, [#allocation6], 128, 128, 8
    $region9: #{tpu_custom_call.1} parent=1 // pred_fallthru
      _
    // Predicated region
    $region10: #{tpu_custom_call.1} parent=1 // pred_check
      _
    $region11: #{tpu_custom_call.1} parent=1 // pred_check_branch
      %41 = sbr.rel (0) target = $region13
    $region12: #{tpu_custom_call.1} parent=1 // pred_region
      %s43 = ssub.s32 2048, 2048
      %44 = vsyncadd [#allocation6], %s43
      %s45 = sshll.u32 [#allocation7], 4
      %s46 = int_to_ptr.vmem [resolvable:$true] %s45
      %51 = dma.hbm_to_vmem [thread:$0]  %s2, 2048, %s46, [#allocation6], 128, 128, 8
    $region13: #{tpu_custom_call.1} parent=1 // pred_fallthru
      _
    // Predicated region
    $region14: #{tpu_custom_call.1} parent=1 // pred_check
      _
    $region15: #{tpu_custom_call.1} parent=1 // pred_check_branch
      %53 = sbr.rel (0) target = $region17
    $region16: #{tpu_custom_call.1} parent=1 // pred_region
      %s55 = ssub.s32 2048, 2048
      %56 = vsyncadd [#allocation9], %s55
      %s57 = sshll.u32 [#allocation8], 4
      %s58 = int_to_ptr.vmem [resolvable:$true] %s57
      %63 = dma.hbm_to_vmem [thread:$0]  %s3, 2048, %s58, [#allocation9], 128, 128, 8
    $region17: #{tpu_custom_call.1} parent=1 // pred_fallthru
      _
    // Predicated region
    $region18: #{tpu_custom_call.1} parent=1 // pred_check
      _
    $region19: #{tpu_custom_call.1} parent=1 // pred_check_branch
      %65 = sbr.rel (0) target = $region21
    $region20: #{tpu_custom_call.1} parent=1 // pred_region
      _
    $region21: #{tpu_custom_call.1} parent=1 // pred_fallthru
      _
    // Predicated region
    $region22: #{tpu_custom_call.1} parent=1 // pred_check
      _
    $region23: #{tpu_custom_call.1} parent=1 // pred_check_branch
      %67 = sbr.rel (0) target = $region25
    $region24: #{tpu_custom_call.1} parent=1 // pred_region
      _
    $region25: #{tpu_custom_call.1} parent=1 // pred_fallthru
      _
    // Predicated region
    $region26: #{tpu_custom_call.1} parent=1 // pred_check
      _
    $region27: #{tpu_custom_call.1} parent=1 // pred_check_branch
      %69 = sbr.rel (0) target = $region29
    $region28: #{tpu_custom_call.1} parent=1 // pred_region
      %70 = dma.done [#allocation3], 128
    $region29: #{tpu_custom_call.1} parent=1 // pred_fallthru
      _
    // Predicated region
    $region30: #{tpu_custom_call.1} parent=1 // pred_check
      _
    $region31: #{tpu_custom_call.1} parent=1 // pred_check_branch
      %72 = sbr.rel (0) target = $region33
    $region32: #{tpu_custom_call.1} parent=1 // pred_region
      %73 = dma.done [#allocation6], 1024
    $region33: #{tpu_custom_call.1} parent=1 // pred_fallthru
      _
    // Predicated region
    $region34: #{tpu_custom_call.1} parent=1 // pred_check
      _
    $region35: #{tpu_custom_call.1} parent=1 // pred_check_branch
      %75 = sbr.rel (0) target = $region37
    $region36: #{tpu_custom_call.1} parent=1 // pred_region
      %76 = dma.done [#allocation6], 2048
    $region37: #{tpu_custom_call.1} parent=1 // pred_fallthru
      _
    // Predicated region
    $region38: #{tpu_custom_call.1} parent=1 // pred_check
      _
    $region39: #{tpu_custom_call.1} parent=1 // pred_check_branch
      %78 = sbr.rel (0) target = $region41
    $region40: #{tpu_custom_call.1} parent=1 // pred_region
      %79 = dma.done [#allocation9], 2048
    $region41: #{tpu_custom_call.1} parent=1 // pred_fallthru
      _
    %v80 = vld [vmem:[#allocation2] sm:$0xff]
    %v81 = vld [vmem:[#allocation7] sm:$0xff]
    %v82 = vld [vmem:[#allocation7 + $0x8] sm:$0xff]
    %v83 = vld [vmem:[#allocation7 + $0x10] sm:$0xff]
    %v84 = vld [vmem:[#allocation7 + $0x18] sm:$0xff]
    %v85 = vld [vmem:[#allocation7 + $0x20] sm:$0xff]
    %v86 = vld [vmem:[#allocation7 + $0x28] sm:$0xff]
    %v87 = vld [vmem:[#allocation7 + $0x30] sm:$0xff]
    %v88 = vld [vmem:[#allocation7 + $0x38] sm:$0xff]
    %v89 = vld [vmem:[#allocation7 + $0x40] sm:$0xff]
    %v90 = vld [vmem:[#allocation7 + $0x48] sm:$0xff]
    %v91 = vld [vmem:[#allocation7 + $0x50] sm:$0xff]
    %v92 = vld [vmem:[#allocation7 + $0x58] sm:$0xff]
    %v93 = vld [vmem:[#allocation7 + $0x60] sm:$0xff]
    %v94 = vld [vmem:[#allocation7 + $0x68] sm:$0xff]
    %v95 = vld [vmem:[#allocation7 + $0x70] sm:$0xff]
    %v96 = vld [vmem:[#allocation7 + $0x78] sm:$0xff]
    %v97 = vld [vmem:[%s4] sm:$0x1]
    %v99 = vlaneseq
    %v100 = vshrl.u32 %v99, 7
    %v101 = vsub.s32 0, %v100
    %v102 = vrot.slane %v97, %v101
    %104 = vmatprep.subr.mxu0 0.0
    %105 = vmatpush1.msra.mxu0 %v96
    %106 = vmatprep.subr.mxu0 0.0
    %107 = vmatpush1.msra.mxu0 %v95
    %108 = vmatprep.subr.mxu0 0.0
    %109 = vmatpush1.msra.mxu0 %v94
    %110 = vmatprep.subr.mxu0 0.0
    %111 = vmatpush1.msra.mxu0 %v93
    %112 = vmatprep.subr.mxu0 0.0
    %113 = vmatpush1.msra.mxu0 %v92
    %114 = vmatprep.subr.mxu0 0.0
    %115 = vmatpush1.msra.mxu0 %v91
    %116 = vmatprep.subr.mxu0 0.0
    %117 = vmatpush1.msra.mxu0 %v90
    %118 = vmatprep.subr.mxu0 0.0
    %119 = vmatpush1.msra.mxu0 %v89
    %120 = vmatprep.subr.mxu0 0.0
    %121 = vmatpush1.msra.mxu0 %v88
    %122 = vmatprep.subr.mxu0 0.0
    %123 = vmatpush1.msra.mxu0 %v87
    %124 = vmatprep.subr.mxu0 0.0
    %125 = vmatpush1.msra.mxu0 %v86
    %126 = vmatprep.subr.mxu0 0.0
    %127 = vmatpush1.msra.mxu0 %v85
    %128 = vmatprep.subr.mxu0 0.0
    %129 = vmatpush1.msra.mxu0 %v84
    %130 = vmatprep.subr.mxu0 0.0
    %131 = vmatpush1.msra.mxu0 %v83
    %132 = vmatprep.subr.mxu0 0.0
    %133 = vmatpush1.msra.mxu0 %v82
    %134 = vmatprep.subr.mxu0 0.0
    %135 = vmatpush1.msra.mxu0 %v81
    %136 = vmatprep.subr.mxu0 0.0
    %137 = vmatpush2.msra.mxu0 0.0
    %138 = vmatprep.subr.mxu0 0.0
    %139 = vmatpush2.msra.mxu0 0.0
    %140 = vmatprep.subr.mxu0 0.0
    %141 = vmatpush2.msra.mxu0 0.0
    %142 = vmatprep.subr.mxu0 0.0
    %143 = vmatpush2.msra.mxu0 0.0
    %144 = vmatprep.subr.mxu0 0.0
    %145 = vmatpush2.msra.mxu0 0.0
    %146 = vmatprep.subr.mxu0 0.0
    %147 = vmatpush2.msra.mxu0 0.0
    %148 = vmatprep.subr.mxu0 0.0
    %149 = vmatpush2.msra.mxu0 0.0
    %150 = vmatprep.subr.mxu0 0.0
    %151 = vmatpush2.msra.mxu0 0.0
    %152 = vmatprep.subr.mxu0 0.0
    %153 = vmatpush2.msra.mxu0 0.0
    %154 = vmatprep.subr.mxu0 0.0
    %155 = vmatpush2.msra.mxu0 0.0
    %156 = vmatprep.subr.mxu0 0.0
    %157 = vmatpush2.msra.mxu0 0.0
    %158 = vmatprep.subr.mxu0 0.0
    %159 = vmatpush2.msra.mxu0 0.0
    %160 = vmatprep.subr.mxu0 0.0
    %161 = vmatpush2.msra.mxu0 0.0
    %162 = vmatprep.subr.mxu0 0.0
    %163 = vmatpush2.msra.mxu0 0.0
    %164 = vmatprep.subr.mxu0 0.0
    %165 = vmatpush2.msra.mxu0 0.0
    %166 = vmatprep.subr.mxu0 0.0
    %167 = vmatpush2.msra.mxu0 0.0
    %168 = vmatprep.mubr.f32.mxu0 0.0
    %169 = vmatmul.mubr.f32.gmra.mxu0 %v80
    %v170 = vpop.f32.mrf.mxu0
    %v171 = vadd.f32 %v102, %v170
    %v172 = vpop.f32.mrf.mxu0
    %173 = vdwg.mxu0
    %v174 = vld [vmem:[%s5] sm:$0x1]
    %v175 = vld [vmem:[#allocation5] sm:$0xff]
    %v176 = vld [vmem:[#allocation5 + $0x8] sm:$0xff]
    %v177 = vld [vmem:[#allocation5 + $0x10] sm:$0xff]
    %v178 = vld [vmem:[#allocation5 + $0x18] sm:$0xff]
    %v179 = vld [vmem:[#allocation5 + $0x20] sm:$0xff]
    %v180 = vld [vmem:[#allocation5 + $0x28] sm:$0xff]
    %v181 = vld [vmem:[#allocation5 + $0x30] sm:$0xff]
    %v182 = vld [vmem:[#allocation5 + $0x38] sm:$0xff]
    %v183 = vld [vmem:[#allocation8] sm:$0xff]
    %v184 = vld [vmem:[#allocation8 + $0x8] sm:$0xff]
    %v185 = vld [vmem:[#allocation8 + $0x10] sm:$0xff]
    %v186 = vld [vmem:[#allocation8 + $0x18] sm:$0xff]
    %v187 = vld [vmem:[#allocation8 + $0x20] sm:$0xff]
    %v188 = vld [vmem:[#allocation8 + $0x28] sm:$0xff]
    %v189 = vld [vmem:[#allocation8 + $0x30] sm:$0xff]
    %v190 = vld [vmem:[#allocation8 + $0x38] sm:$0xff]
    %v191 = vld [vmem:[#allocation8 + $0x40] sm:$0xff]
    %v192 = vld [vmem:[#allocation8 + $0x48] sm:$0xff]
    %v193 = vld [vmem:[#allocation8 + $0x50] sm:$0xff]
    %v194 = vld [vmem:[#allocation8 + $0x58] sm:$0xff]
    %v195 = vld [vmem:[#allocation8 + $0x60] sm:$0xff]
    %v196 = vld [vmem:[#allocation8 + $0x68] sm:$0xff]
    %v197 = vld [vmem:[#allocation8 + $0x70] sm:$0xff]
    %v198 = vld [vmem:[#allocation8 + $0x78] sm:$0xff]
    %199 = vmatprep.subr.mxu0 0.0
    %200 = vmatpush1.msra.mxu0 %v198
    %201 = vmatprep.subr.mxu0 0.0
    %202 = vmatpush1.msra.mxu0 %v197
    %203 = vmatprep.subr.mxu0 0.0
    %204 = vmatpush1.msra.mxu0 %v196
    %205 = vmatprep.subr.mxu0 0.0
    %206 = vmatpush1.msra.mxu0 %v195
    %207 = vmatprep.subr.mxu0 0.0
    %208 = vmatpush1.msra.mxu0 %v194
    %209 = vmatprep.subr.mxu0 0.0
    %210 = vmatpush1.msra.mxu0 %v193
    %211 = vmatprep.subr.mxu0 0.0
    %212 = vmatpush1.msra.mxu0 %v192
    %213 = vmatprep.subr.mxu0 0.0
    %214 = vmatpush1.msra.mxu0 %v191
    %215 = vmatprep.subr.mxu0 0.0
    %216 = vmatpush1.msra.mxu0 %v190
    %217 = vmatprep.subr.mxu0 0.0
    %218 = vmatpush1.msra.mxu0 %v189
    %219 = vmatprep.subr.mxu0 0.0
    %220 = vmatpush1.msra.mxu0 %v188
    %221 = vmatprep.subr.mxu0 0.0
    %222 = vmatpush1.msra.mxu0 %v187
    %223 = vmatprep.subr.mxu0 0.0
    %224 = vmatpush1.msra.mxu0 %v186
    %225 = vmatprep.subr.mxu0 0.0
    %226 = vmatpush1.msra.mxu0 %v185
    %227 = vmatprep.subr.mxu0 0.0
    %228 = vmatpush1.msra.mxu0 %v184
    %229 = vmatprep.subr.mxu0 0.0
    %230 = vmatpush1.msra.mxu0 %v183
    %231 = vmatprep.subr.mxu0 0.0
    %232 = vmatpush2.msra.mxu0 0.0
    %233 = vmatprep.subr.mxu0 0.0
    %234 = vmatpush2.msra.mxu0 0.0
    %235 = vmatprep.subr.mxu0 0.0
    %236 = vmatpush2.msra.mxu0 0.0
    %237 = vmatprep.subr.mxu0 0.0
    %238 = vmatpush2.msra.mxu0 0.0
    %239 = vmatprep.subr.mxu0 0.0
    %240 = vmatpush2.msra.mxu0 0.0
    %241 = vmatprep.subr.mxu0 0.0
    %242 = vmatpush2.msra.mxu0 0.0
    %243 = vmatprep.subr.mxu0 0.0
    %244 = vmatpush2.msra.mxu0 0.0
    %245 = vmatprep.subr.mxu0 0.0
    %246 = vmatpush2.msra.mxu0 0.0
    %247 = vmatprep.subr.mxu0 0.0
    %248 = vmatpush2.msra.mxu0 0.0
    %249 = vmatprep.subr.mxu0 0.0
    %250 = vmatpush2.msra.mxu0 0.0
    %251 = vmatprep.subr.mxu0 0.0
    %252 = vmatpush2.msra.mxu0 0.0
    %253 = vmatprep.subr.mxu0 0.0
    %254 = vmatpush2.msra.mxu0 0.0
    %255 = vmatprep.subr.mxu0 0.0
    %256 = vmatpush2.msra.mxu0 0.0
    %257 = vmatprep.subr.mxu0 0.0
    %258 = vmatpush2.msra.mxu0 0.0
    %259 = vmatprep.subr.mxu0 0.0
    %260 = vmatpush2.msra.mxu0 0.0
    %261 = vmatprep.subr.mxu0 0.0
    %262 = vmatpush2.msra.mxu0 0.0
    %263 = vmatprep.mubr.f32.mxu0 0.0
    %264 = vmatmul.mubr.f32.gmra.mxu0 %v175
    %v265 = vpop.f32.mrf.mxu0
    %v266 = vadd.f32 0.0, %v265
    %v267 = vpop.f32.mrf.mxu0
    %268 = vmatprep.mubr.f32.mxu0 0.0
    %269 = vmatmul.mubr.f32.gmra.mxu0 %v176
    %v270 = vpop.f32.mrf.mxu0
    %v271 = vadd.f32 0.0, %v270
    %v272 = vpop.f32.mrf.mxu0
    %273 = vmatprep.mubr.f32.mxu0 0.0
    %274 = vmatmul.mubr.f32.gmra.mxu0 %v177
    %v275 = vpop.f32.mrf.mxu0
    %v276 = vadd.f32 0.0, %v275
    %v277 = vpop.f32.mrf.mxu0
    %278 = vmatprep.mubr.f32.mxu0 0.0
    %279 = vmatmul.mubr.f32.gmra.mxu0 %v178
    %v280 = vpop.f32.mrf.mxu0
    %v281 = vadd.f32 0.0, %v280
    %v282 = vpop.f32.mrf.mxu0
    %283 = vmatprep.mubr.f32.mxu0 0.0
    %284 = vmatmul.mubr.f32.gmra.mxu0 %v179
    %v285 = vpop.f32.mrf.mxu0
    %v286 = vadd.f32 0.0, %v285
    %v287 = vpop.f32.mrf.mxu0
    %288 = vmatprep.mubr.f32.mxu0 0.0
    %289 = vmatmul.mubr.f32.gmra.mxu0 %v180
    %v290 = vpop.f32.mrf.mxu0
    %v291 = vadd.f32 0.0, %v290
    %v292 = vpop.f32.mrf.mxu0
    %293 = vmatprep.mubr.f32.mxu0 0.0
    %294 = vmatmul.mubr.f32.gmra.mxu0 %v181
    %v295 = vpop.f32.mrf.mxu0
    %v296 = vadd.f32 0.0, %v295
    %v297 = vpop.f32.mrf.mxu0
    %298 = vmatprep.mubr.f32.mxu0 0.0
    %299 = vmatmul.mubr.f32.gmra.mxu0 %v182
    %v300 = vpop.f32.mrf.mxu0
    %v301 = vadd.f32 0.0, %v300
    %v302 = vpop.f32.mrf.mxu0
    %303 = vdwg.mxu0
    %v305 = vcombine.high %v171, %v171
    %v307 = vunpack.c.l.s4 1966171168
    %v308 = vunpack.c.0.s8 %v307
    %v309 = vlaneseq
    %v310 = vshrl.u32 %v309, 7
    %v311 = vsub.s32 %v308, %v310
    %v312 = vrot.slane %v171, %v311
    %v314 = vunpack.c.l.s4 1966171168
    %v315 = vunpack.c.0.s8 %v314
    %v316 = vlaneseq
    %v317 = vshrl.u32 %v316, 7
    %v318 = vsub.s32 %v315, %v317
    %v319 = vrot.slane %v305, %v318
    %v320 = vcombine.high %v312, %v312
    %v321 = vcombine.high %v319, %v319
    %v323 = vunpack.c.l.s4 1966171168
    %v324 = vunpack.c.0.s8 %v323
    %v325 = vlaneseq
    %v326 = vshrl.u32 %v325, 7
    %v327 = vsub.s32 %v324, %v326
    %v328 = vrot.slane %v312, %v327
    %v330 = vunpack.c.l.s4 1966171168
    %v331 = vunpack.c.0.s8 %v330
    %v332 = vlaneseq
    %v333 = vshrl.u32 %v332, 7
    %v334 = vsub.s32 %v331, %v333
    %v335 = vrot.slane %v319, %v334
    %v337 = vunpack.c.l.s4 1966171168
    %v338 = vunpack.c.0.s8 %v337
    %v339 = vlaneseq
    %v340 = vshrl.u32 %v339, 7
    %v341 = vsub.s32 %v338, %v340
    %v342 = vrot.slane %v320, %v341
    %v344 = vunpack.c.l.s4 1966171168
    %v345 = vunpack.c.0.s8 %v344
    %v346 = vlaneseq
    %v347 = vshrl.u32 %v346, 7
    %v348 = vsub.s32 %v345, %v347
    %v349 = vrot.slane %v321, %v348
    %v350 = vcombine.high %v328, %v328
    %v351 = vcombine.high %v335, %v335
    %v352 = vcombine.high %v342, %v342
    %v353 = vcombine.high %v349, %v349
    %v354 = vlaneseq
    %v355 = vshrl.u32 %v354, 7
    %v356 = vsub.s32 0, %v355
    %v357 = vrot.slane %v328, %v356
    %v358 = vlaneseq
    %v359 = vshrl.u32 %v358, 7
    %v360 = vsub.s32 0, %v359
    %v361 = vrot.slane %v342, %v360
    %v362 = vlaneseq
    %v363 = vshrl.u32 %v362, 7
    %v364 = vsub.s32 0, %v363
    %v365 = vrot.slane %v350, %v364
    %v366 = vlaneseq
    %v367 = vshrl.u32 %v366, 7
    %v368 = vsub.s32 0, %v367
    %v369 = vrot.slane %v352, %v368
    %v370 = vlaneseq
    %v371 = vshrl.u32 %v370, 7
    %v372 = vsub.s32 0, %v371
    %v373 = vrot.slane %v335, %v372
    %v374 = vlaneseq
    %v375 = vshrl.u32 %v374, 7
    %v376 = vsub.s32 0, %v375
    %v377 = vrot.slane %v349, %v376
    %v378 = vlaneseq
    %v379 = vshrl.u32 %v378, 7
    %v380 = vsub.s32 0, %v379
    %v381 = vrot.slane %v351, %v380
    %v382 = vlaneseq
    %v383 = vshrl.u32 %v382, 7
    %v384 = vsub.s32 0, %v383
    %v385 = vrot.slane %v353, %v384
    %v394 = vadd.f32 %v357, %v266
    %v395 = vadd.f32 %v361, %v271
    %v396 = vadd.f32 %v365, %v276
    %v397 = vadd.f32 %v369, %v281
    %v398 = vadd.f32 %v373, %v286
    %v399 = vadd.f32 %v377, %v291
    %v400 = vadd.f32 %v381, %v296
    %v401 = vadd.f32 %v385, %v301
    %v402 = vtanh.pop %v394
    %v403 = vtanh.pop %v395
    %v404 = vtanh.pop %v396
    %v405 = vtanh.pop %v397
    %v406 = vtanh.pop %v398
    %v407 = vtanh.pop %v399
    %v408 = vtanh.pop %v400
    %v409 = vtanh.pop %v401
    %v411 = vlaneseq
    %v412 = vshrl.u32 %v411, 7
    %v413 = vsub.s32 0, %v412
    %v414 = vrot.slane %v174, %v413
    %v416 = vmul.f32 %v402, %v414
    %v417 = vmul.f32 %v403, %v414
    %v418 = vmul.f32 %v404, %v414
    %v419 = vmul.f32 %v405, %v414
    %v420 = vmul.f32 %v406, %v414
    %v421 = vmul.f32 %v407, %v414
    %v422 = vmul.f32 %v408, %v414
    %v423 = vmul.f32 %v409, %v414
    %424 = vadd.xlane.f32.xlu0 %v416
    %v425 = vpop.xlane.xlu0 %424
    %426 = vadd.xlane.f32.xlu0 %v417
    %v427 = vpop.xlane.xlu0 %426
    %428 = vadd.xlane.f32.xlu0 %v418
    %v429 = vpop.xlane.xlu0 %428
    %430 = vadd.xlane.f32.xlu0 %v419
    %v431 = vpop.xlane.xlu0 %430
    %432 = vadd.xlane.f32.xlu0 %v420
    %v433 = vpop.xlane.xlu0 %432
    %434 = vadd.xlane.f32.xlu0 %v421
    %v435 = vpop.xlane.xlu0 %434
    %436 = vadd.xlane.f32.xlu0 %v422
    %v437 = vpop.xlane.xlu0 %436
    %438 = vadd.xlane.f32.xlu0 %v423
    %v439 = vpop.xlane.xlu0 %438
    %v448 = vlaneseq
    %v449 = vand.u32 %v448, 127
    %v450 = vlaneseq
    %v451 = vshrl.u32 %v450, 7
    %v452 = vsub.s32 %v449, %v451
    %v453 = vrot.slane %v425, %v452
    %v454 = vlaneseq
    %v455 = vshrl.u32 %v454, 7
    %v456 = vsub.s32 %v449, %v455
    %v457 = vrot.slane %v427, %v456
    %v458 = vlaneseq
    %v459 = vshrl.u32 %v458, 7
    %v460 = vsub.s32 %v449, %v459
    %v461 = vrot.slane %v429, %v460
    %v462 = vlaneseq
    %v463 = vshrl.u32 %v462, 7
    %v464 = vsub.s32 %v449, %v463
    %v465 = vrot.slane %v431, %v464
    %v466 = vlaneseq
    %v467 = vshrl.u32 %v466, 7
    %v468 = vsub.s32 %v449, %v467
    %v469 = vrot.slane %v433, %v468
    %v470 = vlaneseq
    %v471 = vshrl.u32 %v470, 7
    %v472 = vsub.s32 %v449, %v471
    %v473 = vrot.slane %v435, %v472
    %v474 = vlaneseq
    %v475 = vshrl.u32 %v474, 7
    %v476 = vsub.s32 %v449, %v475
    %v477 = vrot.slane %v437, %v476
    %v478 = vlaneseq
    %v479 = vshrl.u32 %v478, 7
    %v480 = vsub.s32 %v449, %v479
    %v481 = vrot.slane %v439, %v480
    %vm482 = vcmask 1041409
    %v483 = vsel %vm482, %v457, %v453
    %vm484 = vcmask 1042434
    %v485 = vsel %vm484, %v461, %v483
    %vm486 = vcmask 1043459
    %v487 = vsel %vm486, %v465, %v485
    %vm488 = vcmask 1044484
    %v489 = vsel %vm488, %v469, %v487
    %vm490 = vcmask 1045509
    %v491 = vsel %vm490, %v473, %v489
    %vm492 = vcmask 1046534
    %v493 = vsel %vm492, %v477, %v491
    %vm494 = vcmask 1047559
    %v495 = vsel %vm494, %v481, %v493
    %vm497 = vcmask 64512
    %498 = vst.msk [vmem:[#allocation11] sm:$0xff] %vm497, %v495
    %v499 = vld [vmem:[#allocation11] sm:$0xff]
    %v500 = vsel %vm497, %v499, -inf
    %501 = vmax.xlane.f32.xlu0 %v500
    %v502 = vpop.xlane.xlu0 %501
    %v503 = vsub.f32 %v499, %v502
    %v504 = vmul.f32 %v503, 1.442695
    %v505 = vpow.pop %v504
    %v506 = vsel %vm497, %v505, 0.0
    %507 = vadd.xlane.f32.xlu0 %v506
    %v508 = vpop.xlane.xlu0 %507
    %v509 = vrcp.pop %v508
    %v510 = vmul.f32 %v505, %v509
    %511 = vst.msk [vmem:[#allocation11] sm:$0xff] %vm497, %v510
    %v512 = vld [vmem:[#allocation5] sm:$0xff]
    %v513 = vld [vmem:[#allocation5 + $0x8] sm:$0xff]
    %v514 = vld [vmem:[#allocation5 + $0x10] sm:$0xff]
    %v515 = vld [vmem:[#allocation5 + $0x18] sm:$0xff]
    %v516 = vld [vmem:[#allocation5 + $0x20] sm:$0xff]
    %v517 = vld [vmem:[#allocation5 + $0x28] sm:$0xff]
    %v518 = vld [vmem:[#allocation5 + $0x30] sm:$0xff]
    %v519 = vld [vmem:[#allocation5 + $0x38] sm:$0xff]
    %v520 = vlaneseq
    %v521 = vshrl.u32 %v520, 7
    %v522 = vsub.s32 0, %v521
    %v523 = vrot.slane %v510, %v522
    %525 = vbcast.lane.b32.xlu0 %v523, 256
    %v526 = vpop.permute.xlu0 %525
    %v527 = vlaneseq
    %v528 = vshrl.u32 %v527, 7
    %v529 = vsub.s32 1, %v528
    %v530 = vrot.slane %v510, %v529
    %532 = vbcast.lane.b32.xlu0 %v530, 256
    %v533 = vpop.permute.xlu0 %532
    %v534 = vlaneseq
    %v535 = vshrl.u32 %v534, 7
    %v536 = vsub.s32 2, %v535
    %v537 = vrot.slane %v510, %v536
    %539 = vbcast.lane.b32.xlu0 %v537, 256
    %v540 = vpop.permute.xlu0 %539
    %v541 = vlaneseq
    %v542 = vshrl.u32 %v541, 7
    %v543 = vsub.s32 3, %v542
    %v544 = vrot.slane %v510, %v543
    %546 = vbcast.lane.b32.xlu0 %v544, 256
    %v547 = vpop.permute.xlu0 %546
    %v548 = vlaneseq
    %v549 = vshrl.u32 %v548, 7
    %v550 = vsub.s32 4, %v549
    %v551 = vrot.slane %v510, %v550
    %553 = vbcast.lane.b32.xlu0 %v551, 256
    %v554 = vpop.permute.xlu0 %553
    %v555 = vlaneseq
    %v556 = vshrl.u32 %v555, 7
    %v557 = vsub.s32 5, %v556
    %v558 = vrot.slane %v510, %v557
    %560 = vbcast.lane.b32.xlu0 %v558, 256
    %v561 = vpop.permute.xlu0 %560
    %v562 = vlaneseq
    %v563 = vshrl.u32 %v562, 7
    %v564 = vsub.s32 6, %v563
    %v565 = vrot.slane %v510, %v564
    %567 = vbcast.lane.b32.xlu0 %v565, 256
    %v568 = vpop.permute.xlu0 %567
    %v569 = vlaneseq
    %v570 = vshrl.u32 %v569, 7
    %v571 = vsub.s32 7, %v570
    %v572 = vrot.slane %v510, %v571
    %574 = vbcast.lane.b32.xlu0 %v572, 256
    %v575 = vpop.permute.xlu0 %574
    %v576 = vmul.f32 %v526, %v512
    %v577 = vmul.f32 %v533, %v513
    %v578 = vmul.f32 %v540, %v514
    %v579 = vmul.f32 %v547, %v515
    %v580 = vmul.f32 %v554, %v516
    %v581 = vmul.f32 %v561, %v517
    %v582 = vmul.f32 %v568, %v518
    %v583 = vmul.f32 %v575, %v519
    %v584 = vrot.slane %v576, 4
    %v585 = vadd.f32 %v576, %v584
    %v586 = vrot.slane %v585, 2
    %v587 = vadd.f32 %v585, %v586
    %v588 = vrot.slane %v587, 1
    %v589 = vadd.f32 %v587, %v588
    %v590 = vrot.slane %v577, 4
    %v591 = vadd.f32 %v577, %v590
    %v592 = vrot.slane %v591, 2
    %v593 = vadd.f32 %v591, %v592
    %v594 = vrot.slane %v593, 1
    %v595 = vadd.f32 %v593, %v594
    %v596 = vrot.slane %v578, 4
    %v597 = vadd.f32 %v578, %v596
    %v598 = vrot.slane %v597, 2
    %v599 = vadd.f32 %v597, %v598
    %v600 = vrot.slane %v599, 1
    %v601 = vadd.f32 %v599, %v600
    %v602 = vrot.slane %v579, 4
    %v603 = vadd.f32 %v579, %v602
    %v604 = vrot.slane %v603, 2
    %v605 = vadd.f32 %v603, %v604
    %v606 = vrot.slane %v605, 1
    %v607 = vadd.f32 %v605, %v606
    %v608 = vrot.slane %v580, 4
    %v609 = vadd.f32 %v580, %v608
    %v610 = vrot.slane %v609, 2
    %v611 = vadd.f32 %v609, %v610
    %v612 = vrot.slane %v611, 1
    %v613 = vadd.f32 %v611, %v612
    %v614 = vrot.slane %v581, 4
    %v615 = vadd.f32 %v581, %v614
    %v616 = vrot.slane %v615, 2
    %v617 = vadd.f32 %v615, %v616
    %v618 = vrot.slane %v617, 1
    %v619 = vadd.f32 %v617, %v618
    %v620 = vrot.slane %v582, 4
    %v621 = vadd.f32 %v582, %v620
    %v622 = vrot.slane %v621, 2
    %v623 = vadd.f32 %v621, %v622
    %v624 = vrot.slane %v623, 1
    %v625 = vadd.f32 %v623, %v624
    %v626 = vrot.slane %v583, 4
    %v627 = vadd.f32 %v583, %v626
    %v628 = vrot.slane %v627, 2
    %v629 = vadd.f32 %v627, %v628
    %v630 = vrot.slane %v629, 1
    %v631 = vadd.f32 %v629, %v630
    %v632 = vadd.f32 %v589, 0.0
    %v633 = vadd.f32 %v595, 0.0
    %v634 = vadd.f32 %v601, 0.0
    %v635 = vadd.f32 %v607, 0.0
    %v636 = vadd.f32 %v613, 0.0
    %v637 = vadd.f32 %v619, 0.0
    %v638 = vadd.f32 %v625, 0.0
    %v639 = vadd.f32 %v631, 0.0
    %v648 = vsel %vm482, %v633, %v632
    %v649 = vsel %vm484, %v634, %v648
    %v650 = vsel %vm486, %v635, %v649
    %v651 = vsel %vm488, %v636, %v650
    %v652 = vsel %vm490, %v637, %v651
    %v653 = vsel %vm492, %v638, %v652
    %v654 = vsel %vm494, %v639, %v653
    %656 = vst [vmem:[#allocation10] sm:$0xff] %v654
    // Predicated region
    $region42: #{tpu_custom_call.1} parent=1 // pred_check
      _
    $region43: #{tpu_custom_call.1} parent=1 // pred_check_branch
      %658 = sbr.rel (0) target = $region45
    $region44: #{tpu_custom_call.1} parent=1 // pred_region
      %s660 = ssub.s32 128, 128
      %661 = vsyncadd [#allocation4], %s660
      %s663 = sshll.u32 [#allocation10], 4
      %s664 = int_to_ptr.vmem [resolvable:$true] %s663
      %666 = dma.vmem_to_hbm [thread:$0]  %s664, 128, %s6, [#allocation4]
    $region45: #{tpu_custom_call.1} parent=1 // pred_fallthru
      _
    // Predicated region
    $region46: #{tpu_custom_call.1} parent=1 // pred_check
      _
    $region47: #{tpu_custom_call.1} parent=1 // pred_check_branch
      %668 = sbr.rel (0) target = $region49
    $region48: #{tpu_custom_call.1} parent=1 // pred_region
      %s670 = ssub.s32 128, 128
      %671 = vsyncadd [#allocation12], %s670
      %s673 = sshll.u32 [#allocation11], 4
      %s674 = int_to_ptr.vmem [resolvable:$true] %s673
      %676 = dma.vmem_to_hbm [thread:$0]  %s674, 128, %s7, [#allocation12]
    $region49: #{tpu_custom_call.1} parent=1 // pred_fallthru
      _
    // Predicated region
    $region50: #{tpu_custom_call.1} parent=1 // pred_check
      _
    $region51: #{tpu_custom_call.1} parent=1 // pred_check_branch
      %678 = sbr.rel (0) target = $region53
    $region52: #{tpu_custom_call.1} parent=1 // pred_region
      %679 = dma.done [#allocation4], 128
    $region53: #{tpu_custom_call.1} parent=1 // pred_fallthru
      _
    // Predicated region
    $region54: #{tpu_custom_call.1} parent=1 // pred_check
      _
    $region55: #{tpu_custom_call.1} parent=1 // pred_check_branch
      %681 = sbr.rel (0) target = $region57
    $region56: #{tpu_custom_call.1} parent=1 // pred_region
      %682 = dma.done [#allocation12], 128
    $region57: #{tpu_custom_call.1} parent=1 // pred_fallthru
      _
    %683 = vsyncpa [#allocation3], 1
    %684 = vsyncpa [#allocation6], 1
    %685 = vsyncpa [#allocation9], 1
    %686 = vsyncpa [#allocation4], 1
    %687 = vsyncpa [#allocation12], 1

</llo_original>
